<compile_context>
chip_gen: v5e
topology: v5e:2x2
jax: 0.10.0
libtpu: 0.0.40
codegen_flags: <defaults>
</compile_context>

<pallas_src>
import jax
import jax.numpy as jnp
import numpy as np
from jax.experimental import pallas as pl
from jax.experimental.pallas import tpu as pltpu


def _round_up(x, m):
    return ((x + m - 1) // m) * m


def _decoder_kernel(x_ref, we_ref, be_ref, w1_ref, b1_ref, w2_ref, b2_ref,
                    wo_ref, bo_ref, o_ref):
    # x_ref: (TB, input_dim) f32       we_ref: (input_dim, R) bf16   be_ref: (1, R) f32
    # w1_ref/w2_ref: (n_blocks, R, R) bf16   b1_ref/b2_ref: (n_blocks, 1, R) f32
    # wo_ref: (R, OUT_PAD) bf16        bo_ref: (1, OUT_PAD) f32
    x = x_ref[...].astype(jnp.bfloat16)  # free in-kernel VPU cast (no wrapper pass)

    # ion_embed: bf16 MXU matmul, f32 accumulation, f32 bias add.
    h = jnp.dot(x, we_ref[...], preferred_element_type=jnp.float32) + be_ref[...]

    # resnet blocks (n_blocks static -> unrolled; all matmuls on the MXU in bf16,
    # residual add + ReLU kept in f32 on the VPU).
    n_blocks = w1_ref.shape[0]
    for i in range(n_blocks):
        y = jnp.dot(h.astype(jnp.bfloat16), w1_ref[i],
                    preferred_element_type=jnp.float32) + b1_ref[i]
        y = jnp.maximum(y, 0.0)                     # act_fx = ReLU
        y = jnp.dot(y.astype(jnp.bfloat16), w2_ref[i],
                    preferred_element_type=jnp.float32) + b2_ref[i]
        h = jnp.maximum(y + h, 0.0)                 # residual + activation

    # output head: lane-dense (OUT_PAD multiple of 128) -> unmasked vst.
    out = jnp.dot(h.astype(jnp.bfloat16), wo_ref[...],
                  preferred_element_type=jnp.float32) + bo_ref[...]
    o_ref[...] = out.astype(o_ref.dtype)


def _const_spec(shape):
    """BlockSpec for a grid-invariant (weight/bias) block: same tile every step.

    Constant index map -> double buffering buys nothing, so request a single
    buffer to halve resident weight VMEM (important on v7x's 64 MiB VMEM when
    R / n_blocks grow). Falls back to the default if Buffered isn't available.
    """
    ndim = len(shape)
    idx = lambda i: (0,) * ndim
    if hasattr(pl, "Buffered"):
        try:
            return pl.BlockSpec(shape, idx, pipeline_mode=pl.Buffered(1))
        except TypeError:
            pass
    return pl.BlockSpec(shape, idx)


def prepare_params(params):
    """One-time weight preparation (call once, reuse across forward calls).

    - casts matmul operands to bf16 (what actually gets DMA'd each call),
    - zero-pads the output head to a multiple of 128 lanes (lane-dense store),
    - keeps biases in f32 (added to the f32 accumulator).
    """
    we, be = params["we"], params["be"]
    w1, b1 = params["w1"], params["b1"]
    w2, b2 = params["w2"], params["b2"]
    wo, bo = params["wo"], params["bo"]
    R = we.shape[1]
    output_dim = wo.shape[1]
    out_pad = _round_up(max(output_dim, 128), 128)

    wo_p = jnp.zeros((R, out_pad), wo.dtype).at[:, :output_dim].set(wo)
    bo_p = jnp.zeros((1, out_pad), bo.dtype).at[:, :output_dim].set(bo)

    return {
        "we": we.astype(jnp.bfloat16), "be": be.astype(jnp.float32),
        "w1": w1.astype(jnp.bfloat16), "b1": b1.astype(jnp.float32),
        "w2": w2.astype(jnp.bfloat16), "b2": b2.astype(jnp.float32),
        "wo": wo_p.astype(jnp.bfloat16), "bo": bo_p.astype(jnp.float32),
        "output_dim": output_dim, "out_pad": out_pad,
    }


def cid_decoder_forward(x, prep, *, tile_b=512, num_cores=1, slice_output=True):
    """x: (B, input_dim) float32.  prep: output of prepare_params().

    tile_b: batch tile. Default 512 (multiple of 256 -> full MXU rows,
            amortizes per-step overhead + output DMA); rounded to 16 for bf16
            sublane packing. The h/y intermediates live in VMEM, so large
            tiles are fine — VMEM stays far under the limit even at 1024.
    num_cores: set to 2 on v7x to keep >=2 grid steps for megacore sharding;
            leave 1 on v5e/v6e (single TensorCore) so tiles stay full-size.
    slice_output: if False, return the lane-padded (B, out_pad) f32 array and
            let the consumer slice — avoids an extra XLA copy pass that
            re-reads the whole padded output just to strip the padding.
    """
    B, input_dim = x.shape
    we, be = prep["we"], prep["be"]
    w1, b1 = prep["w1"], prep["b1"]
    w2, b2 = prep["w2"], prep["b2"]
    wo, bo = prep["wo"], prep["bo"]
    R = we.shape[1]
    n_blocks = w1.shape[0]
    output_dim, out_pad = prep["output_dim"], prep["out_pad"]

    # Batch tile: multiple of 16 (bf16 sublane packing), capped by B (and by a
    # per-core share only when num_cores > 1, i.e. v7x).
    tile_b = max(16, min(_round_up(tile_b, 16), _round_up(B, 16)))
    if num_cores > 1:
        tile_b = min(tile_b, max(16, _round_up(pl.cdiv(B, num_cores), 16)))
    grid = (pl.cdiv(B, tile_b),)
    # NOTE: when B % tile_b != 0 the final partial block's padded input rows
    # hold unspecified data; the corresponding output rows are never returned
    # to the caller, so valid rows are unaffected. Do not "fix" by reading them.

    # VMEM budget estimate: single-buffered weights + double-buffered x/out tiles.
    weight_bytes = 2 * (we.size + w1.size + w2.size + wo.size) \
        + 4 * (be.size + b1.size + b2.size + bo.size)
    tile_bytes = 2 * (tile_b * input_dim * 4 + tile_b * out_pad * 4)
    vmem_limit = int(min(max(2 * (weight_bytes + tile_bytes), 32 << 20), 96 << 20))

    out = pl.pallas_call(
        _decoder_kernel,
        out_shape=jax.ShapeDtypeStruct((B, out_pad), jnp.float32),
        grid=grid,
        in_specs=[
            pl.BlockSpec((tile_b, input_dim), lambda i: (i, 0)),   # x tile (f32)
            _const_spec((input_dim, R)),                           # we (bf16)
            _const_spec((1, R)),                                   # be (f32)
            _const_spec((n_blocks, R, R)),                         # w1 (bf16)
            _const_spec((n_blocks, 1, R)),                         # b1 (f32)
            _const_spec((n_blocks, R, R)),                         # w2 (bf16)
            _const_spec((n_blocks, 1, R)),                         # b2 (f32)
            _const_spec((R, out_pad)),                             # wo (bf16, padded)
            _const_spec((1, out_pad)),                             # bo (f32, padded)
        ],
        out_specs=pl.BlockSpec((tile_b, out_pad), lambda i: (i, 0)),
        compiler_params=pltpu.CompilerParams(
            dimension_semantics=("parallel",),
            vmem_limit_bytes=vmem_limit),
    )(x, we, be, w1, b1, w2, b2, wo, bo)

    if slice_output:
        return out[:, :output_dim]
    return out  # (B, out_pad); valid columns are [:output_dim]


def init_params(key, input_dim, regression_dim, output_dim, n_blocks):
    ks = jax.random.split(key, 8)
    s = 0.05
    return {
        "we": s * jax.random.normal(ks[0], (input_dim, regression_dim), jnp.float32),
        "be": s * jax.random.normal(ks[1], (1, regression_dim), jnp.float32),
        "w1": s * jax.random.normal(ks[2], (n_blocks, regression_dim, regression_dim), jnp.float32),
        "b1": s * jax.random.normal(ks[3], (n_blocks, 1, regression_dim), jnp.float32),
        "w2": s * jax.random.normal(ks[4], (n_blocks, regression_dim, regression_dim), jnp.float32),
        "b2": s * jax.random.normal(ks[5], (n_blocks, 1, regression_dim), jnp.float32),
        "wo": s * jax.random.normal(ks[6], (regression_dim, output_dim), jnp.float32),
        "bo": s * jax.random.normal(ks[7], (1, output_dim), jnp.float32),
    }


def reference_forward(x, params):
    """Pure f32 reference (bf16 kernel checked against it with loose tolerance)."""
    h = x @ params["we"] + params["be"]
    n_blocks = params["w1"].shape[0]
    for i in range(n_blocks):
        y = jnp.maximum(h @ params["w1"][i] + params["b1"][i], 0.0)
        y = y @ params["w2"][i] + params["b2"][i]
        h = jnp.maximum(y + h, 0.0)
    return h @ params["wo"] + params["bo"]


if __name__ == "__main__":
    B, input_dim, regression_dim, output_dim, n_blocks = 16, 32, 128, 16, 2

    key = jax.random.PRNGKey(0)
    kx, kp = jax.random.split(key)
    x = jax.random.normal(kx, (B, input_dim), jnp.float32)
    params = init_params(kp, input_dim, regression_dim, output_dim, n_blocks)

    prep = prepare_params(params)                      # one-time weight prep
    out = cid_decoder_forward(x, prep)                 # sliced (B, output_dim)
    out = jax.block_until_ready(out)
    assert out.shape == (B, output_dim)

    # Padded fast path also works (consumer-side slicing).
    out_pad = jax.block_until_ready(cid_decoder_forward(x, prep, slice_output=False))
    assert out_pad.shape[0] == B and out_pad.shape[1] % 128 == 0

    ref = jax.block_until_ready(reference_forward(x, params))
    # bf16 matmuls with f32 accumulation vs pure-f32 reference -> loose tolerance.
    np.testing.assert_allclose(np.asarray(out), np.asarray(ref), rtol=5e-2, atol=1e-2)
    np.testing.assert_allclose(np.asarray(out_pad[:, :output_dim]), np.asarray(ref),
                               rtol=5e-2, atol=1e-2)

    print("KERNEL_OK")
</pallas_src>

<mosaic_0001>
module attributes {stable_mosaic.version = 11 : i64} {
  func.func @_decoder_kernel(%arg0: i32, %arg1: memref<16x32xf32, #tpu.memory_space<vmem>>, %arg2: memref<32x128xbf16, #tpu.memory_space<vmem>>, %arg3: memref<1x128xf32, #tpu.memory_space<vmem>>, %arg4: memref<2x128x128xbf16, #tpu.memory_space<vmem>>, %arg5: memref<2x1x128xf32, #tpu.memory_space<vmem>>, %arg6: memref<2x128x128xbf16, #tpu.memory_space<vmem>>, %arg7: memref<2x1x128xf32, #tpu.memory_space<vmem>>, %arg8: memref<128x128xbf16, #tpu.memory_space<vmem>>, %arg9: memref<1x128xf32, #tpu.memory_space<vmem>>, %arg10: memref<16x128xf32, #tpu.memory_space<vmem>>) attributes {dimension_semantics = [#tpu.dimension_semantics<parallel>], iteration_bounds = array<i64: 1>, scalar_prefetch = 0 : i64, scratch_operands = 0 : i64, tpu.core_type = #tpu.core_type<tc>, window_params = [{transform_indices = @transform_0, window_bounds = array<i64: 16, 32>}, {pipeline_mode = #tpu.pipeline_mode<synchronous>, transform_indices = @transform_1, window_bounds = array<i64: 32, 128>}, {pipeline_mode = #tpu.pipeline_mode<synchronous>, transform_indices = @transform_2, window_bounds = array<i64: 1, 128>}, {pipeline_mode = #tpu.pipeline_mode<synchronous>, transform_indices = @transform_3, window_bounds = array<i64: 2, 128, 128>}, {pipeline_mode = #tpu.pipeline_mode<synchronous>, transform_indices = @transform_4, window_bounds = array<i64: 2, 1, 128>}, {pipeline_mode = #tpu.pipeline_mode<synchronous>, transform_indices = @transform_5, window_bounds = array<i64: 2, 128, 128>}, {pipeline_mode = #tpu.pipeline_mode<synchronous>, transform_indices = @transform_6, window_bounds = array<i64: 2, 1, 128>}, {pipeline_mode = #tpu.pipeline_mode<synchronous>, transform_indices = @transform_7, window_bounds = array<i64: 128, 128>}, {pipeline_mode = #tpu.pipeline_mode<synchronous>, transform_indices = @transform_8, window_bounds = array<i64: 1, 128>}, {transform_indices = @transform_9, window_bounds = array<i64: 16, 128>}]} {
    %c0 = arith.constant 0 : index
    %c0_0 = arith.constant 0 : index
    %0 = vector.load %arg1[%c0, %c0_0] : memref<16x32xf32, #tpu.memory_space<vmem>>, vector<16x32xf32>
    %1 = arith.truncf %0 : vector<16x32xf32> to vector<16x32xbf16>
    %c0_1 = arith.constant 0 : index
    %c0_2 = arith.constant 0 : index
    %2 = vector.load %arg2[%c0_1, %c0_2] : memref<32x128xbf16, #tpu.memory_space<vmem>>, vector<32x128xbf16>
    %cst = arith.constant dense<0.000000e+00> : vector<16x128xf32>
    %3 = tpu.matmul %1, %2, %cst {dimension_numbers = #tpu.dot_dimension_numbers<[1], [0], [0], [1], [0, 0, 1, 1], [], []>} : vector<16x32xbf16>, vector<32x128xbf16>, vector<16x128xf32> -> vector<16x128xf32>
    %c0_3 = arith.constant 0 : index
    %c0_4 = arith.constant 0 : index
    %4 = vector.load %arg3[%c0_3, %c0_4] : memref<1x128xf32, #tpu.memory_space<vmem>>, vector<1x128xf32>
    %5 = vector.broadcast %4 : vector<1x128xf32> to vector<16x128xf32>
    %6 = arith.addf %3, %5 : vector<16x128xf32>
    %7 = arith.truncf %6 : vector<16x128xf32> to vector<16x128xbf16>
    %c0_5 = arith.constant 0 : index
    %c0_6 = arith.constant 0 : index
    %c0_7 = arith.constant 0 : index
    %8 = vector.load %arg4[%c0_5, %c0_6, %c0_7] : memref<2x128x128xbf16, #tpu.memory_space<vmem>>, vector<1x128x128xbf16>
    %9 = vector.shape_cast %8 : vector<1x128x128xbf16> to vector<128x128xbf16>
    %cst_8 = arith.constant dense<0.000000e+00> : vector<16x128xf32>
    %10 = tpu.matmul %7, %9, %cst_8 {dimension_numbers = #tpu.dot_dimension_numbers<[1], [0], [0], [1], [0, 0, 1, 1], [], []>} : vector<16x128xbf16>, vector<128x128xbf16>, vector<16x128xf32> -> vector<16x128xf32>
    %c0_9 = arith.constant 0 : index
    %c0_10 = arith.constant 0 : index
    %c0_11 = arith.constant 0 : index
    %11 = vector.load %arg5[%c0_9, %c0_10, %c0_11] : memref<2x1x128xf32, #tpu.memory_space<vmem>>, vector<1x1x128xf32>
    %12 = vector.shape_cast %11 : vector<1x1x128xf32> to vector<1x128xf32>
    %13 = vector.broadcast %12 : vector<1x128xf32> to vector<16x128xf32>
    %14 = arith.addf %10, %13 : vector<16x128xf32>
    %cst_12 = arith.constant 0.000000e+00 : f32
    %15 = vector.broadcast %cst_12 : f32 to vector<16x128xf32>
    %16 = arith.maximumf %14, %15 : vector<16x128xf32>
    %17 = arith.truncf %16 : vector<16x128xf32> to vector<16x128xbf16>
    %c0_13 = arith.constant 0 : index
    %c0_14 = arith.constant 0 : index
    %c0_15 = arith.constant 0 : index
    %18 = vector.load %arg6[%c0_13, %c0_14, %c0_15] : memref<2x128x128xbf16, #tpu.memory_space<vmem>>, vector<1x128x128xbf16>
    %19 = vector.shape_cast %18 : vector<1x128x128xbf16> to vector<128x128xbf16>
    %cst_16 = arith.constant dense<0.000000e+00> : vector<16x128xf32>
    %20 = tpu.matmul %17, %19, %cst_16 {dimension_numbers = #tpu.dot_dimension_numbers<[1], [0], [0], [1], [0, 0, 1, 1], [], []>} : vector<16x128xbf16>, vector<128x128xbf16>, vector<16x128xf32> -> vector<16x128xf32>
    %c0_17 = arith.constant 0 : index
    %c0_18 = arith.constant 0 : index
    %c0_19 = arith.constant 0 : index
    %21 = vector.load %arg7[%c0_17, %c0_18, %c0_19] : memref<2x1x128xf32, #tpu.memory_space<vmem>>, vector<1x1x128xf32>
    %22 = vector.shape_cast %21 : vector<1x1x128xf32> to vector<1x128xf32>
    %23 = vector.broadcast %22 : vector<1x128xf32> to vector<16x128xf32>
    %24 = arith.addf %20, %23 : vector<16x128xf32>
    %25 = arith.addf %24, %6 : vector<16x128xf32>
    %cst_20 = arith.constant 0.000000e+00 : f32
    %26 = vector.broadcast %cst_20 : f32 to vector<16x128xf32>
    %27 = arith.maximumf %25, %26 : vector<16x128xf32>
    %28 = arith.truncf %27 : vector<16x128xf32> to vector<16x128xbf16>
    %c1 = arith.constant 1 : index
    %c0_21 = arith.constant 0 : index
    %c0_22 = arith.constant 0 : index
    %29 = vector.load %arg4[%c1, %c0_21, %c0_22] : memref<2x128x128xbf16, #tpu.memory_space<vmem>>, vector<1x128x128xbf16>
    %30 = vector.shape_cast %29 : vector<1x128x128xbf16> to vector<128x128xbf16>
    %cst_23 = arith.constant dense<0.000000e+00> : vector<16x128xf32>
    %31 = tpu.matmul %28, %30, %cst_23 {dimension_numbers = #tpu.dot_dimension_numbers<[1], [0], [0], [1], [0, 0, 1, 1], [], []>} : vector<16x128xbf16>, vector<128x128xbf16>, vector<16x128xf32> -> vector<16x128xf32>
    %c1_24 = arith.constant 1 : index
    %c0_25 = arith.constant 0 : index
    %c0_26 = arith.constant 0 : index
    %32 = vector.load %arg5[%c1_24, %c0_25, %c0_26] : memref<2x1x128xf32, #tpu.memory_space<vmem>>, vector<1x1x128xf32>
    %33 = vector.shape_cast %32 : vector<1x1x128xf32> to vector<1x128xf32>
    %34 = vector.broadcast %33 : vector<1x128xf32> to vector<16x128xf32>
    %35 = arith.addf %31, %34 : vector<16x128xf32>
    %cst_27 = arith.constant 0.000000e+00 : f32
    %36 = vector.broadcast %cst_27 : f32 to vector<16x128xf32>
    %37 = arith.maximumf %35, %36 : vector<16x128xf32>
    %38 = arith.truncf %37 : vector<16x128xf32> to vector<16x128xbf16>
    %c1_28 = arith.constant 1 : index
    %c0_29 = arith.constant 0 : index
    %c0_30 = arith.constant 0 : index
    %39 = vector.load %arg6[%c1_28, %c0_29, %c0_30] : memref<2x128x128xbf16, #tpu.memory_space<vmem>>, vector<1x128x128xbf16>
    %40 = vector.shape_cast %39 : vector<1x128x128xbf16> to vector<128x128xbf16>
    %cst_31 = arith.constant dense<0.000000e+00> : vector<16x128xf32>
    %41 = tpu.matmul %38, %40, %cst_31 {dimension_numbers = #tpu.dot_dimension_numbers<[1], [0], [0], [1], [0, 0, 1, 1], [], []>} : vector<16x128xbf16>, vector<128x128xbf16>, vector<16x128xf32> -> vector<16x128xf32>
    %c1_32 = arith.constant 1 : index
    %c0_33 = arith.constant 0 : index
    %c0_34 = arith.constant 0 : index
    %42 = vector.load %arg7[%c1_32, %c0_33, %c0_34] : memref<2x1x128xf32, #tpu.memory_space<vmem>>, vector<1x1x128xf32>
    %43 = vector.shape_cast %42 : vector<1x1x128xf32> to vector<1x128xf32>
    %44 = vector.broadcast %43 : vector<1x128xf32> to vector<16x128xf32>
    %45 = arith.addf %41, %44 : vector<16x128xf32>
    %46 = arith.addf %45, %27 : vector<16x128xf32>
    %cst_35 = arith.constant 0.000000e+00 : f32
    %47 = vector.broadcast %cst_35 : f32 to vector<16x128xf32>
    %48 = arith.maximumf %46, %47 : vector<16x128xf32>
    %49 = arith.truncf %48 : vector<16x128xf32> to vector<16x128xbf16>
    %c0_36 = arith.constant 0 : index
    %c0_37 = arith.constant 0 : index
    %50 = vector.load %arg8[%c0_36, %c0_37] : memref<128x128xbf16, #tpu.memory_space<vmem>>, vector<128x128xbf16>
    %cst_38 = arith.constant dense<0.000000e+00> : vector<16x128xf32>
    %51 = tpu.matmul %49, %50, %cst_38 {dimension_numbers = #tpu.dot_dimension_numbers<[1], [0], [0], [1], [0, 0, 1, 1], [], []>} : vector<16x128xbf16>, vector<128x128xbf16>, vector<16x128xf32> -> vector<16x128xf32>
    %c0_39 = arith.constant 0 : index
    %c0_40 = arith.constant 0 : index
    %52 = vector.load %arg9[%c0_39, %c0_40] : memref<1x128xf32, #tpu.memory_space<vmem>>, vector<1x128xf32>
    %53 = vector.broadcast %52 : vector<1x128xf32> to vector<16x128xf32>
    %54 = arith.addf %51, %53 : vector<16x128xf32>
    %c0_41 = arith.constant 0 : index
    %c0_42 = arith.constant 0 : index
    %55 = vector.load %arg10[%c0_41, %c0_42] : memref<16x128xf32, #tpu.memory_space<vmem>>, vector<16x128xf32>
    tpu.vector_store %arg10[%c0_41, %c0_42], %54 {strides = array<i32>} : memref<16x128xf32, #tpu.memory_space<vmem>>, vector<16x128xf32>,
    return
  }
  func.func @transform_0(%arg0: i32) -> (i32, i32) {
    %c0_i32 = arith.constant 0 : i32
    %c0_i32_0 = arith.constant 0 : i32
    return %arg0, %c0_i32 : i32, i32
  }
  func.func @transform_1(%arg0: i32) -> (i32, i32) {
    %c0_i32 = arith.constant 0 : i32
    %c0_i32_0 = arith.constant 0 : i32
    %c0_i32_1 = arith.constant 0 : i32
    return %c0_i32, %c0_i32_0 : i32, i32
  }
  func.func @transform_2(%arg0: i32) -> (i32, i32) {
    %c0_i32 = arith.constant 0 : i32
    %c0_i32_0 = arith.constant 0 : i32
    %c0_i32_1 = arith.constant 0 : i32
    return %c0_i32, %c0_i32_0 : i32, i32
  }
  func.func @transform_3(%arg0: i32) -> (i32, i32, i32) {
    %c0_i32 = arith.constant 0 : i32
    %c0_i32_0 = arith.constant 0 : i32
    %c0_i32_1 = arith.constant 0 : i32
    %c0_i32_2 = arith.constant 0 : i32
    return %c0_i32, %c0_i32_0, %c0_i32_1 : i32, i32, i32
  }
  func.func @transform_4(%arg0: i32) -> (i32, i32, i32) {
    %c0_i32 = arith.constant 0 : i32
    %c0_i32_0 = arith.constant 0 : i32
    %c0_i32_1 = arith.constant 0 : i32
    %c0_i32_2 = arith.constant 0 : i32
    return %c0_i32, %c0_i32_0, %c0_i32_1 : i32, i32, i32
  }
  func.func @transform_5(%arg0: i32) -> (i32, i32, i32) {
    %c0_i32 = arith.constant 0 : i32
    %c0_i32_0 = arith.constant 0 : i32
    %c0_i32_1 = arith.constant 0 : i32
    %c0_i32_2 = arith.constant 0 : i32
    return %c0_i32, %c0_i32_0, %c0_i32_1 : i32, i32, i32
  }
  func.func @transform_6(%arg0: i32) -> (i32, i32, i32) {
    %c0_i32 = arith.constant 0 : i32
    %c0_i32_0 = arith.constant 0 : i32
    %c0_i32_1 = arith.constant 0 : i32
    %c0_i32_2 = arith.constant 0 : i32
    return %c0_i32, %c0_i32_0, %c0_i32_1 : i32, i32, i32
  }
  func.func @transform_7(%arg0: i32) -> (i32, i32) {
    %c0_i32 = arith.constant 0 : i32
    %c0_i32_0 = arith.constant 0 : i32
    %c0_i32_1 = arith.constant 0 : i32
    return %c0_i32, %c0_i32_0 : i32, i32
  }
  func.func @transform_8(%arg0: i32) -> (i32, i32) {
    %c0_i32 = arith.constant 0 : i32
    %c0_i32_0 = arith.constant 0 : i32
    %c0_i32_1 = arith.constant 0 : i32
    return %c0_i32, %c0_i32_0 : i32, i32
  }
  func.func @transform_9(%arg0: i32) -> (i32, i32) {
    %c0_i32 = arith.constant 0 : i32
    %c0_i32_0 = arith.constant 0 : i32
    return %arg0, %c0_i32 : i32, i32
  }
}

</mosaic_0001>

<llo_original>
// kernel: tpu_custom_call.1
$region0: #{tpu_custom_call.1}
  #allocation0 [shape = 'u32[]', space=smem, size = 0x4, offset = 0x4, fixed_abs, tag = 'smem constant byte address 0x4 - core index']
  #allocation1 [shape = 'u32[72,128]{1,0:T(1,128)}', space=vmem, size = 0x9000, scoped, tag = 'internal scratch']
  %s0 = inlined_call_operand.hbm [shape: f32[16,32], index: 0, kind: input, shape index: {}]
  %s1 = inlined_call_operand.hbm [shape: bf16[32,128], index: 1, kind: input, shape index: {}]
  %s2 = inlined_call_operand.hbm [shape: f32[1,128], index: 2, kind: input, shape index: {}]
  %s3 = inlined_call_operand.hbm [shape: bf16[2,128,128], index: 3, kind: input, shape index: {}]
  %s4 = inlined_call_operand.vmem [shape: f32[2,1,128], index: 4, kind: input, shape index: {}]
  %s5 = inlined_call_operand.hbm [shape: bf16[2,128,128], index: 5, kind: input, shape index: {}]
  %s6 = inlined_call_operand.vmem [shape: f32[2,1,128], index: 6, kind: input, shape index: {}]
  %s7 = inlined_call_operand.hbm [shape: bf16[128,128], index: 7, kind: input, shape index: {}]
  %s8 = inlined_call_operand.vmem [shape: f32[1,128], index: 8, kind: input, shape index: {}]
  %s9 = inlined_call_operand.hbm [shape: f32[16,128], index: 9, kind: output, shape index: {}]
  %s10 = sld [smem:[#allocation0]]
  $region70: #{tpu_custom_call.1} parent=0
    _
  %s12 = ssub.s32 1, %s10
  %s13 = scalar_select 0, %s12, %s10
  $region1: #{tpu_custom_call.1} parent=0
    #allocation2 [shape = 'u8[8192]{0}', space=vmem, size = 0x2000, scoped, tag = 'input window, operand 0, single buffered']
    #allocation3 [shape = 's32[1]{0}', space=sflag, size = 0x4, scoped, tag = 'scoped memory for tpu_custom_call.1']
    #allocation4 [shape = 's32[1]{0}', space=sflag, size = 0x4, scoped, tag = 'scoped memory for tpu_custom_call.1']
    #allocation5 [shape = 'u8[8192]{0}', space=vmem, size = 0x2000, scoped, tag = 'input window, operand 1, single buffered']
    #allocation6 [shape = 's32[1]{0}', space=sflag, size = 0x4, scoped, tag = 'scoped memory for tpu_custom_call.1']
    #allocation7 [shape = 'u8[512]{0}', space=vmem, size = 0x400, scoped, tag = 'input window, operand 2, single buffered']
    #allocation8 [shape = 'u8[65536]{0}', space=vmem, size = 0x10000, scoped, tag = 'input window, operand 3, single buffered']
    #allocation9 [shape = 's32[1]{0}', space=sflag, size = 0x4, scoped, tag = 'scoped memory for tpu_custom_call.1']
    #allocation10 [shape = 'u8[65536]{0}', space=vmem, size = 0x10000, scoped, tag = 'input window, operand 5, single buffered']
    #allocation11 [shape = 'u8[32768]{0}', space=vmem, size = 0x8000, scoped, tag = 'input window, operand 7, single buffered']
    #allocation12 [shape = 's32[1]{0}', space=sflag, size = 0x4, scoped, tag = 'scoped memory for tpu_custom_call.1']
    #allocation13 [shape = 'u8[8192]{0}', space=vmem, size = 0x2000, scoped, tag = 'output window, operand 0, single buffered']
    %14 = vsyncpa [#allocation3], 0
    %15 = vsyncpa [#allocation6], 0
    %16 = vsyncpa [#allocation9], 0
    %17 = vsyncpa [#allocation12], 0
    %18 = vsyncpa [#allocation4], 0
    // Predicated region
    $region2: #{tpu_custom_call.1} parent=1 // pred_check
      _
    $region3: #{tpu_custom_call.1} parent=1 // pred_check_branch
      %20 = sbr.rel (0) target = $region5
    $region4: #{tpu_custom_call.1} parent=1 // pred_region
      %22 = vsyncadd [#allocation3], 0
      %s23 = sshll.u32 %s0, 4
      %s24 = int_to_ptr.hbm [resolvable:$true] %s23
      %s25 = sshll.u32 [#allocation2], 4
      %s26 = int_to_ptr.vmem [resolvable:$true] %s25
      %31 = dma.hbm_to_vmem [thread:$0]  %s24, 256, %s26, [#allocation3], 128, 128, 8
    $region5: #{tpu_custom_call.1} parent=1 // pred_fallthru
      _
    // Predicated region
    $region6: #{tpu_custom_call.1} parent=1 // pred_check
      _
    $region7: #{tpu_custom_call.1} parent=1 // pred_check_branch
      %33 = sbr.rel (0) target = $region9
    $region8: #{tpu_custom_call.1} parent=1 // pred_region
      %35 = vsyncadd [#allocation6], 0
      %s36 = sshll.u32 %s1, 4
      %s37 = int_to_ptr.hbm [resolvable:$true] %s36
      %s38 = sshll.u32 [#allocation5], 4
      %s39 = int_to_ptr.vmem [resolvable:$true] %s38
      %44 = dma.hbm_to_vmem [thread:$0]  %s37, 256, %s39, [#allocation6], 64, 64, 4
    $region9: #{tpu_custom_call.1} parent=1 // pred_fallthru
      _
    // Predicated region
    $region10: #{tpu_custom_call.1} parent=1 // pred_check
      _
    $region11: #{tpu_custom_call.1} parent=1 // pred_check_branch
      %46 = sbr.rel (0) target = $region13
    $region12: #{tpu_custom_call.1} parent=1 // pred_region
      %48 = vsyncadd [#allocation6], 0
      %s50 = sshll.u32 %s2, 4
      %s51 = int_to_ptr.hbm [resolvable:$true] %s50
      %s52 = sshll.u32 [#allocation7], 4
      %s53 = int_to_ptr.vmem [resolvable:$true] %s52
      %55 = dma.hbm_to_vmem [thread:$0]  %s51, 16, %s53, [#allocation6]
    $region13: #{tpu_custom_call.1} parent=1 // pred_fallthru
      _
    // Predicated region
    $region14: #{tpu_custom_call.1} parent=1 // pred_check
      _
    $region15: #{tpu_custom_call.1} parent=1 // pred_check_branch
      %57 = sbr.rel (0) target = $region17
    $region16: #{tpu_custom_call.1} parent=1 // pred_region
      %59 = vsyncadd [#allocation9], 0
      %s60 = sshll.u32 %s3, 4
      %s61 = int_to_ptr.hbm [resolvable:$true] %s60
      %s62 = sshll.u32 [#allocation8], 4
      %s63 = int_to_ptr.vmem [resolvable:$true] %s62
      %68 = dma.hbm_to_vmem [thread:$0]  %s61, 2048, %s63, [#allocation9], 64, 64, 4
    $region17: #{tpu_custom_call.1} parent=1 // pred_fallthru
      _
    // Predicated region
    $region18: #{tpu_custom_call.1} parent=1 // pred_check
      _
    $region19: #{tpu_custom_call.1} parent=1 // pred_check_branch
      %70 = sbr.rel (0) target = $region21
    $region20: #{tpu_custom_call.1} parent=1 // pred_region
      _
    $region21: #{tpu_custom_call.1} parent=1 // pred_fallthru
      _
    // Predicated region
    $region22: #{tpu_custom_call.1} parent=1 // pred_check
      _
    $region23: #{tpu_custom_call.1} parent=1 // pred_check_branch
      %72 = sbr.rel (0) target = $region25
    $region24: #{tpu_custom_call.1} parent=1 // pred_region
      %74 = vsyncadd [#allocation9], 0
      %s75 = sshll.u32 %s5, 4
      %s76 = int_to_ptr.hbm [resolvable:$true] %s75
      %s77 = sshll.u32 [#allocation10], 4
      %s78 = int_to_ptr.vmem [resolvable:$true] %s77
      %83 = dma.hbm_to_vmem [thread:$0]  %s76, 2048, %s78, [#allocation9], 64, 64, 4
    $region25: #{tpu_custom_call.1} parent=1 // pred_fallthru
      _
    // Predicated region
    $region26: #{tpu_custom_call.1} parent=1 // pred_check
      _
    $region27: #{tpu_custom_call.1} parent=1 // pred_check_branch
      %85 = sbr.rel (0) target = $region29
    $region28: #{tpu_custom_call.1} parent=1 // pred_region
      _
    $region29: #{tpu_custom_call.1} parent=1 // pred_fallthru
      _
    // Predicated region
    $region30: #{tpu_custom_call.1} parent=1 // pred_check
      _
    $region31: #{tpu_custom_call.1} parent=1 // pred_check_branch
      %87 = sbr.rel (0) target = $region33
    $region32: #{tpu_custom_call.1} parent=1 // pred_region
      %89 = vsyncadd [#allocation12], 0
      %s90 = sshll.u32 %s7, 4
      %s91 = int_to_ptr.hbm [resolvable:$true] %s90
      %s92 = sshll.u32 [#allocation11], 4
      %s93 = int_to_ptr.vmem [resolvable:$true] %s92
      %98 = dma.hbm_to_vmem [thread:$0]  %s91, 1024, %s93, [#allocation12], 64, 64, 4
    $region33: #{tpu_custom_call.1} parent=1 // pred_fallthru
      _
    // Predicated region
    $region34: #{tpu_custom_call.1} parent=1 // pred_check
      _
    $region35: #{tpu_custom_call.1} parent=1 // pred_check_branch
      %100 = sbr.rel (0) target = $region37
    $region36: #{tpu_custom_call.1} parent=1 // pred_region
      _
    $region37: #{tpu_custom_call.1} parent=1 // pred_fallthru
      _
    // Predicated region
    $region38: #{tpu_custom_call.1} parent=1 // pred_check
      _
    $region39: #{tpu_custom_call.1} parent=1 // pred_check_branch
      %102 = sbr.rel (0) target = $region41
    $region40: #{tpu_custom_call.1} parent=1 // pred_region
      %104 = dma.done [#allocation3], 256
    $region41: #{tpu_custom_call.1} parent=1 // pred_fallthru
      _
    // Predicated region
    $region42: #{tpu_custom_call.1} parent=1 // pred_check
      _
    $region43: #{tpu_custom_call.1} parent=1 // pred_check_branch
      %106 = sbr.rel (0) target = $region45
    $region44: #{tpu_custom_call.1} parent=1 // pred_region
      %108 = dma.done [#allocation6], 256
    $region45: #{tpu_custom_call.1} parent=1 // pred_fallthru
      _
    // Predicated region
    $region46: #{tpu_custom_call.1} parent=1 // pred_check
      _
    $region47: #{tpu_custom_call.1} parent=1 // pred_check_branch
      %110 = sbr.rel (0) target = $region49
    $region48: #{tpu_custom_call.1} parent=1 // pred_region
      %112 = dma.done [#allocation6], 16
    $region49: #{tpu_custom_call.1} parent=1 // pred_fallthru
      _
    // Predicated region
    $region50: #{tpu_custom_call.1} parent=1 // pred_check
      _
    $region51: #{tpu_custom_call.1} parent=1 // pred_check_branch
      %114 = sbr.rel (0) target = $region53
    $region52: #{tpu_custom_call.1} parent=1 // pred_region
      %116 = dma.done [#allocation9], 2048
    $region53: #{tpu_custom_call.1} parent=1 // pred_fallthru
      _
    // Predicated region
    $region54: #{tpu_custom_call.1} parent=1 // pred_check
      _
    $region55: #{tpu_custom_call.1} parent=1 // pred_check_branch
      %118 = sbr.rel (0) target = $region57
    $region56: #{tpu_custom_call.1} parent=1 // pred_region
      %120 = dma.done [#allocation9], 2048
    $region57: #{tpu_custom_call.1} parent=1 // pred_fallthru
      _
    // Predicated region
    $region58: #{tpu_custom_call.1} parent=1 // pred_check
      _
    $region59: #{tpu_custom_call.1} parent=1 // pred_check_branch
      %122 = sbr.rel (0) target = $region61
    $region60: #{tpu_custom_call.1} parent=1 // pred_region
      %124 = dma.done [#allocation12], 1024
    $region61: #{tpu_custom_call.1} parent=1 // pred_fallthru
      _
    %v126 = vld [vmem:[#allocation2] sm:$0xff]
    %v127 = vld [vmem:[#allocation2 + $0x8] sm:$0xff]
    %v128 = vpack.c.bf16 %v127, %v126
    %v129 = vld [vmem:[#allocation5] sm:$0xf]
    %v130 = vld [vmem:[#allocation5 + $0x4] sm:$0xf]
    %v131 = vld [vmem:[#allocation5 + $0x8] sm:$0xf]
    %v132 = vld [vmem:[#allocation5 + $0xc] sm:$0xf]
    %v133 = vld [vmem:[#allocation7] sm:$0x1]
    %v135 = vperm.slane %v133, 0
    %v141 = vunpack.c.l.b16 %v129
    %v142 = vunpack.c.l.b16 %v130
    %v143 = vunpack.c.l.b16 %v131
    %v144 = vunpack.c.l.b16 %v132
    %v145 = vpack.c.b16 %v142, %v141
    %v146 = vpack.c.b16 %v144, %v143
    %vm149 = vcmask 261120
    %v151 = vsel %vm149, %v128, 0
    %153 = vmatpush.bf16.msra.mxu0 0
    %154 = vmatpush.bf16.msra.mxu0 0
    %155 = vmatpush.bf16.msra.mxu0 0
    %156 = vmatpush.bf16.msra.mxu0 0
    %157 = vmatpush.bf16.msra.mxu0 0
    %158 = vmatpush.bf16.msra.mxu0 0
    %159 = vmatpush.bf16.msra.mxu0 %v146
    %160 = vmatpush.bf16.msra.mxu0 %v145
    %161 = vmatmul.bf16.gmra.mxu0 %v151
    %v162 = vpop.f32.mrf.mxu0
    %v163 = vadd.f32 %v135, %v162
    %v164 = vpop.f32.mrf.mxu0
    %v165 = vadd.f32 %v135, %v164
    %166 = vdwg.mxu0
    %v167 = vpack.c.bf16 %v165, %v163
    %v168 = vld [vmem:[#allocation8] sm:$0xf]
    %v169 = vld [vmem:[#allocation8 + $0x4] sm:$0xf]
    %v170 = vld [vmem:[#allocation8 + $0x8] sm:$0xf]
    %v171 = vld [vmem:[#allocation8 + $0xc] sm:$0xf]
    %v172 = vld [vmem:[#allocation8 + $0x10] sm:$0xf]
    %v173 = vld [vmem:[#allocation8 + $0x14] sm:$0xf]
    %v174 = vld [vmem:[#allocation8 + $0x18] sm:$0xf]
    %v175 = vld [vmem:[#allocation8 + $0x1c] sm:$0xf]
    %v176 = vld [vmem:[#allocation8 + $0x20] sm:$0xf]
    %v177 = vld [vmem:[#allocation8 + $0x24] sm:$0xf]
    %v178 = vld [vmem:[#allocation8 + $0x28] sm:$0xf]
    %v179 = vld [vmem:[#allocation8 + $0x2c] sm:$0xf]
    %v180 = vld [vmem:[#allocation8 + $0x30] sm:$0xf]
    %v181 = vld [vmem:[#allocation8 + $0x34] sm:$0xf]
    %v182 = vld [vmem:[#allocation8 + $0x38] sm:$0xf]
    %v183 = vld [vmem:[#allocation8 + $0x3c] sm:$0xf]
    %v184 = vld [vmem:[%s4] sm:$0x1]
    %v186 = vperm.slane %v184, 0
    %v204 = vunpack.c.l.b16 %v168
    %v205 = vunpack.c.l.b16 %v169
    %v206 = vunpack.c.l.b16 %v170
    %v207 = vunpack.c.l.b16 %v171
    %v208 = vunpack.c.l.b16 %v172
    %v209 = vunpack.c.l.b16 %v173
    %v210 = vunpack.c.l.b16 %v174
    %v211 = vunpack.c.l.b16 %v175
    %v212 = vunpack.c.l.b16 %v176
    %v213 = vunpack.c.l.b16 %v177
    %v214 = vunpack.c.l.b16 %v178
    %v215 = vunpack.c.l.b16 %v179
    %v216 = vunpack.c.l.b16 %v180
    %v217 = vunpack.c.l.b16 %v181
    %v218 = vunpack.c.l.b16 %v182
    %v219 = vunpack.c.l.b16 %v183
    %v220 = vpack.c.b16 %v205, %v204
    %v221 = vpack.c.b16 %v207, %v206
    %v222 = vpack.c.b16 %v209, %v208
    %v223 = vpack.c.b16 %v211, %v210
    %v224 = vpack.c.b16 %v213, %v212
    %v225 = vpack.c.b16 %v215, %v214
    %v226 = vpack.c.b16 %v217, %v216
    %v227 = vpack.c.b16 %v219, %v218
    %236 = vmatpush.bf16.msra.mxu0 %v227
    %237 = vmatpush.bf16.msra.mxu0 %v226
    %238 = vmatpush.bf16.msra.mxu0 %v225
    %239 = vmatpush.bf16.msra.mxu0 %v224
    %240 = vmatpush.bf16.msra.mxu0 %v223
    %241 = vmatpush.bf16.msra.mxu0 %v222
    %242 = vmatpush.bf16.msra.mxu0 %v221
    %243 = vmatpush.bf16.msra.mxu0 %v220
    %244 = vmatmul.bf16.gmra.mxu0 %v167
    %v245 = vpop.f32.mrf.mxu0
    %v246 = vadd.f32 %v186, %v245
    %v247 = vpop.f32.mrf.mxu0
    %v248 = vadd.f32 %v186, %v247
    %249 = vdwg.mxu0
    %v250 = vmax.f32 %v246, 0.0
    %v251 = vmax.f32 %v248, 0.0
    %v252 = vpack.c.bf16 %v251, %v250
    %v253 = vld [vmem:[#allocation10] sm:$0xf]
    %v254 = vld [vmem:[#allocation10 + $0x4] sm:$0xf]
    %v255 = vld [vmem:[#allocation10 + $0x8] sm:$0xf]
    %v256 = vld [vmem:[#allocation10 + $0xc] sm:$0xf]
    %v257 = vld [vmem:[#allocation10 + $0x10] sm:$0xf]
    %v258 = vld [vmem:[#allocation10 + $0x14] sm:$0xf]
    %v259 = vld [vmem:[#allocation10 + $0x18] sm:$0xf]
    %v260 = vld [vmem:[#allocation10 + $0x1c] sm:$0xf]
    %v261 = vld [vmem:[#allocation10 + $0x20] sm:$0xf]
    %v262 = vld [vmem:[#allocation10 + $0x24] sm:$0xf]
    %v263 = vld [vmem:[#allocation10 + $0x28] sm:$0xf]
    %v264 = vld [vmem:[#allocation10 + $0x2c] sm:$0xf]
    %v265 = vld [vmem:[#allocation10 + $0x30] sm:$0xf]
    %v266 = vld [vmem:[#allocation10 + $0x34] sm:$0xf]
    %v267 = vld [vmem:[#allocation10 + $0x38] sm:$0xf]
    %v268 = vld [vmem:[#allocation10 + $0x3c] sm:$0xf]
    %v269 = vld [vmem:[%s6] sm:$0x1]
    %v271 = vperm.slane %v269, 0
    %v289 = vunpack.c.l.b16 %v253
    %v290 = vunpack.c.l.b16 %v254
    %v291 = vunpack.c.l.b16 %v255
    %v292 = vunpack.c.l.b16 %v256
    %v293 = vunpack.c.l.b16 %v257
    %v294 = vunpack.c.l.b16 %v258
    %v295 = vunpack.c.l.b16 %v259
    %v296 = vunpack.c.l.b16 %v260
    %v297 = vunpack.c.l.b16 %v261
    %v298 = vunpack.c.l.b16 %v262
    %v299 = vunpack.c.l.b16 %v263
    %v300 = vunpack.c.l.b16 %v264
    %v301 = vunpack.c.l.b16 %v265
    %v302 = vunpack.c.l.b16 %v266
    %v303 = vunpack.c.l.b16 %v267
    %v304 = vunpack.c.l.b16 %v268
    %v305 = vpack.c.b16 %v290, %v289
    %v306 = vpack.c.b16 %v292, %v291
    %v307 = vpack.c.b16 %v294, %v293
    %v308 = vpack.c.b16 %v296, %v295
    %v309 = vpack.c.b16 %v298, %v297
    %v310 = vpack.c.b16 %v300, %v299
    %v311 = vpack.c.b16 %v302, %v301
    %v312 = vpack.c.b16 %v304, %v303
    %321 = vmatpush.bf16.msra.mxu0 %v312
    %322 = vmatpush.bf16.msra.mxu0 %v311
    %323 = vmatpush.bf16.msra.mxu0 %v310
    %324 = vmatpush.bf16.msra.mxu0 %v309
    %325 = vmatpush.bf16.msra.mxu0 %v308
    %326 = vmatpush.bf16.msra.mxu0 %v307
    %327 = vmatpush.bf16.msra.mxu0 %v306
    %328 = vmatpush.bf16.msra.mxu0 %v305
    %329 = vmatmul.bf16.gmra.mxu0 %v252
    %v330 = vpop.f32.mrf.mxu0
    %v331 = vadd.f32 %v271, %v330
    %v332 = vpop.f32.mrf.mxu0
    %v333 = vadd.f32 %v271, %v332
    %334 = vdwg.mxu0
    %v335 = vadd.f32 %v331, %v163
    %v336 = vadd.f32 %v333, %v165
    %v337 = vmax.f32 %v335, 0.0
    %v338 = vmax.f32 %v336, 0.0
    %v339 = vpack.c.bf16 %v338, %v337
    %s340 = scalar_lea.vmem [#allocation8], 64
    %v341 = vld [vmem:[%s340] sm:$0xf]
    %v342 = vld [vmem:[%s340 + $0x4] sm:$0xf]
    %v343 = vld [vmem:[%s340 + $0x8] sm:$0xf]
    %v344 = vld [vmem:[%s340 + $0xc] sm:$0xf]
    %v345 = vld [vmem:[%s340 + $0x10] sm:$0xf]
    %v346 = vld [vmem:[%s340 + $0x14] sm:$0xf]
    %v347 = vld [vmem:[%s340 + $0x18] sm:$0xf]
    %v348 = vld [vmem:[%s340 + $0x1c] sm:$0xf]
    %v349 = vld [vmem:[%s340 + $0x20] sm:$0xf]
    %v350 = vld [vmem:[%s340 + $0x24] sm:$0xf]
    %v351 = vld [vmem:[%s340 + $0x28] sm:$0xf]
    %v352 = vld [vmem:[%s340 + $0x2c] sm:$0xf]
    %v353 = vld [vmem:[%s340 + $0x30] sm:$0xf]
    %v354 = vld [vmem:[%s340 + $0x34] sm:$0xf]
    %v355 = vld [vmem:[%s340 + $0x38] sm:$0xf]
    %v356 = vld [vmem:[%s340 + $0x3c] sm:$0xf]
    %s357 = scalar_lea.vmem %s4, 1
    %v358 = vld [vmem:[%s357] sm:$0x1]
    %v360 = vperm.slane %v358, 0
    %v378 = vunpack.c.l.b16 %v341
    %v379 = vunpack.c.l.b16 %v342
    %v380 = vunpack.c.l.b16 %v343
    %v381 = vunpack.c.l.b16 %v344
    %v382 = vunpack.c.l.b16 %v345
    %v383 = vunpack.c.l.b16 %v346
    %v384 = vunpack.c.l.b16 %v347
    %v385 = vunpack.c.l.b16 %v348
    %v386 = vunpack.c.l.b16 %v349
    %v387 = vunpack.c.l.b16 %v350
    %v388 = vunpack.c.l.b16 %v351
    %v389 = vunpack.c.l.b16 %v352
    %v390 = vunpack.c.l.b16 %v353
    %v391 = vunpack.c.l.b16 %v354
    %v392 = vunpack.c.l.b16 %v355
    %v393 = vunpack.c.l.b16 %v356
    %v394 = vpack.c.b16 %v379, %v378
    %v395 = vpack.c.b16 %v381, %v380
    %v396 = vpack.c.b16 %v383, %v382
    %v397 = vpack.c.b16 %v385, %v384
    %v398 = vpack.c.b16 %v387, %v386
    %v399 = vpack.c.b16 %v389, %v388
    %v400 = vpack.c.b16 %v391, %v390
    %v401 = vpack.c.b16 %v393, %v392
    %410 = vmatpush.bf16.msra.mxu0 %v401
    %411 = vmatpush.bf16.msra.mxu0 %v400
    %412 = vmatpush.bf16.msra.mxu0 %v399
    %413 = vmatpush.bf16.msra.mxu0 %v398
    %414 = vmatpush.bf16.msra.mxu0 %v397
    %415 = vmatpush.bf16.msra.mxu0 %v396
    %416 = vmatpush.bf16.msra.mxu0 %v395
    %417 = vmatpush.bf16.msra.mxu0 %v394
    %418 = vmatmul.bf16.gmra.mxu0 %v339
    %v419 = vpop.f32.mrf.mxu0
    %v420 = vadd.f32 %v360, %v419
    %v421 = vpop.f32.mrf.mxu0
    %v422 = vadd.f32 %v360, %v421
    %423 = vdwg.mxu0
    %v424 = vmax.f32 %v420, 0.0
    %v425 = vmax.f32 %v422, 0.0
    %v426 = vpack.c.bf16 %v425, %v424
    %s427 = scalar_lea.vmem [#allocation10], 64
    %v428 = vld [vmem:[%s427] sm:$0xf]
    %v429 = vld [vmem:[%s427 + $0x4] sm:$0xf]
    %v430 = vld [vmem:[%s427 + $0x8] sm:$0xf]
    %v431 = vld [vmem:[%s427 + $0xc] sm:$0xf]
    %v432 = vld [vmem:[%s427 + $0x10] sm:$0xf]
    %v433 = vld [vmem:[%s427 + $0x14] sm:$0xf]
    %v434 = vld [vmem:[%s427 + $0x18] sm:$0xf]
    %v435 = vld [vmem:[%s427 + $0x1c] sm:$0xf]
    %v436 = vld [vmem:[%s427 + $0x20] sm:$0xf]
    %v437 = vld [vmem:[%s427 + $0x24] sm:$0xf]
    %v438 = vld [vmem:[%s427 + $0x28] sm:$0xf]
    %v439 = vld [vmem:[%s427 + $0x2c] sm:$0xf]
    %v440 = vld [vmem:[%s427 + $0x30] sm:$0xf]
    %v441 = vld [vmem:[%s427 + $0x34] sm:$0xf]
    %v442 = vld [vmem:[%s427 + $0x38] sm:$0xf]
    %v443 = vld [vmem:[%s427 + $0x3c] sm:$0xf]
    %s444 = scalar_lea.vmem %s6, 1
    %v445 = vld [vmem:[%s444] sm:$0x1]
    %v447 = vperm.slane %v445, 0
    %v465 = vunpack.c.l.b16 %v428
    %v466 = vunpack.c.l.b16 %v429
    %v467 = vunpack.c.l.b16 %v430
    %v468 = vunpack.c.l.b16 %v431
    %v469 = vunpack.c.l.b16 %v432
    %v470 = vunpack.c.l.b16 %v433
    %v471 = vunpack.c.l.b16 %v434
    %v472 = vunpack.c.l.b16 %v435
    %v473 = vunpack.c.l.b16 %v436
    %v474 = vunpack.c.l.b16 %v437
    %v475 = vunpack.c.l.b16 %v438
    %v476 = vunpack.c.l.b16 %v439
    %v477 = vunpack.c.l.b16 %v440
    %v478 = vunpack.c.l.b16 %v441
    %v479 = vunpack.c.l.b16 %v442
    %v480 = vunpack.c.l.b16 %v443
    %v481 = vpack.c.b16 %v466, %v465
    %v482 = vpack.c.b16 %v468, %v467
    %v483 = vpack.c.b16 %v470, %v469
    %v484 = vpack.c.b16 %v472, %v471
    %v485 = vpack.c.b16 %v474, %v473
    %v486 = vpack.c.b16 %v476, %v475
    %v487 = vpack.c.b16 %v478, %v477
    %v488 = vpack.c.b16 %v480, %v479
    %497 = vmatpush.bf16.msra.mxu0 %v488
    %498 = vmatpush.bf16.msra.mxu0 %v487
    %499 = vmatpush.bf16.msra.mxu0 %v486
    %500 = vmatpush.bf16.msra.mxu0 %v485
    %501 = vmatpush.bf16.msra.mxu0 %v484
    %502 = vmatpush.bf16.msra.mxu0 %v483
    %503 = vmatpush.bf16.msra.mxu0 %v482
    %504 = vmatpush.bf16.msra.mxu0 %v481
    %505 = vmatmul.bf16.gmra.mxu0 %v426
    %v506 = vpop.f32.mrf.mxu0
    %v507 = vadd.f32 %v447, %v506
    %v508 = vpop.f32.mrf.mxu0
    %v509 = vadd.f32 %v447, %v508
    %510 = vdwg.mxu0
    %v511 = vadd.f32 %v507, %v337
    %v512 = vadd.f32 %v509, %v338
    %v513 = vmax.f32 %v511, 0.0
    %v514 = vmax.f32 %v512, 0.0
    %v515 = vpack.c.bf16 %v514, %v513
    %v516 = vld [vmem:[#allocation11] sm:$0xf]
    %v517 = vld [vmem:[#allocation11 + $0x4] sm:$0xf]
    %v518 = vld [vmem:[#allocation11 + $0x8] sm:$0xf]
    %v519 = vld [vmem:[#allocation11 + $0xc] sm:$0xf]
    %v520 = vld [vmem:[#allocation11 + $0x10] sm:$0xf]
    %v521 = vld [vmem:[#allocation11 + $0x14] sm:$0xf]
    %v522 = vld [vmem:[#allocation11 + $0x18] sm:$0xf]
    %v523 = vld [vmem:[#allocation11 + $0x1c] sm:$0xf]
    %v524 = vld [vmem:[#allocation11 + $0x20] sm:$0xf]
    %v525 = vld [vmem:[#allocation11 + $0x24] sm:$0xf]
    %v526 = vld [vmem:[#allocation11 + $0x28] sm:$0xf]
    %v527 = vld [vmem:[#allocation11 + $0x2c] sm:$0xf]
    %v528 = vld [vmem:[#allocation11 + $0x30] sm:$0xf]
    %v529 = vld [vmem:[#allocation11 + $0x34] sm:$0xf]
    %v530 = vld [vmem:[#allocation11 + $0x38] sm:$0xf]
    %v531 = vld [vmem:[#allocation11 + $0x3c] sm:$0xf]
    %v532 = vld [vmem:[%s8] sm:$0x1]
    %v534 = vperm.slane %v532, 0
    %v552 = vunpack.c.l.b16 %v516
    %v553 = vunpack.c.l.b16 %v517
    %v554 = vunpack.c.l.b16 %v518
    %v555 = vunpack.c.l.b16 %v519
    %v556 = vunpack.c.l.b16 %v520
    %v557 = vunpack.c.l.b16 %v521
    %v558 = vunpack.c.l.b16 %v522
    %v559 = vunpack.c.l.b16 %v523
    %v560 = vunpack.c.l.b16 %v524
    %v561 = vunpack.c.l.b16 %v525
    %v562 = vunpack.c.l.b16 %v526
    %v563 = vunpack.c.l.b16 %v527
    %v564 = vunpack.c.l.b16 %v528
    %v565 = vunpack.c.l.b16 %v529
    %v566 = vunpack.c.l.b16 %v530
    %v567 = vunpack.c.l.b16 %v531
    %v568 = vpack.c.b16 %v553, %v552
    %v569 = vpack.c.b16 %v555, %v554
    %v570 = vpack.c.b16 %v557, %v556
    %v571 = vpack.c.b16 %v559, %v558
    %v572 = vpack.c.b16 %v561, %v560
    %v573 = vpack.c.b16 %v563, %v562
    %v574 = vpack.c.b16 %v565, %v564
    %v575 = vpack.c.b16 %v567, %v566
    %584 = vmatpush.bf16.msra.mxu0 %v575
    %585 = vmatpush.bf16.msra.mxu0 %v574
    %586 = vmatpush.bf16.msra.mxu0 %v573
    %587 = vmatpush.bf16.msra.mxu0 %v572
    %588 = vmatpush.bf16.msra.mxu0 %v571
    %589 = vmatpush.bf16.msra.mxu0 %v570
    %590 = vmatpush.bf16.msra.mxu0 %v569
    %591 = vmatpush.bf16.msra.mxu0 %v568
    %592 = vmatmul.bf16.gmra.mxu0 %v515
    %v593 = vpop.f32.mrf.mxu0
    %v594 = vadd.f32 %v534, %v593
    %v595 = vpop.f32.mrf.mxu0
    %v596 = vadd.f32 %v534, %v595
    %597 = vdwg.mxu0
    %598 = vst [vmem:[#allocation13] sm:$0xff] %v594
    %599 = vst [vmem:[#allocation13 + $0x8] sm:$0xff] %v596
    // Predicated region
    $region62: #{tpu_custom_call.1} parent=1 // pred_check
      _
    $region63: #{tpu_custom_call.1} parent=1 // pred_check_branch
      %601 = sbr.rel (0) target = $region65
    $region64: #{tpu_custom_call.1} parent=1 // pred_region
      %603 = vsyncadd [#allocation4], 0
      %s604 = sshll.u32 [#allocation13], 4
      %s605 = int_to_ptr.vmem [resolvable:$true] %s604
      %s606 = sshll.u32 %s9, 4
      %s607 = int_to_ptr.hbm [resolvable:$true] %s606
      %612 = dma.vmem_to_hbm [thread:$0]  %s605, 256, %s607, [#allocation4], 128, 128, 8
    $region65: #{tpu_custom_call.1} parent=1 // pred_fallthru
      _
    // Predicated region
    $region66: #{tpu_custom_call.1} parent=1 // pred_check
      _
    $region67: #{tpu_custom_call.1} parent=1 // pred_check_branch
      %614 = sbr.rel (0) target = $region69
    $region68: #{tpu_custom_call.1} parent=1 // pred_region
      %616 = dma.done [#allocation4], 256
    $region69: #{tpu_custom_call.1} parent=1 // pred_fallthru
      _
    %617 = vsyncpa [#allocation3], 1
    %618 = vsyncpa [#allocation6], 1
    %619 = vsyncpa [#allocation9], 1
    %620 = vsyncpa [#allocation12], 1
    %621 = vsyncpa [#allocation4], 1

</llo_original>
